<compile_context>
chip_gen: v6e
topology: v6e:2x2x1
jax: 0.10.0
libtpu: 0.0.40
codegen_flags: <defaults>
</compile_context>

<pallas_src>
import jax
import jax.numpy as jnp
from jax.experimental import pallas as pl
from jax.experimental.pallas import tpu as pltpu


def mlp_kernel(x_ref, w1_ref, b1_ref, w2_ref, b2_ref, w3_ref, b3_ref, o_ref):
    # x_ref: (D_in, bt)   w1_ref: (H, D_in)  b1_ref: (H, 1)
    # w2_ref: (H, H)      b2_ref: (H, 1)
    # w3_ref: (D_out, H)  b3_ref: (D_out, 1) o_ref: (D_out, bt)
    d_in = x_ref.shape[0]

    # Layer 1: K = D_in (=2) is far too small for the MXU -> VPU broadcast-FMAs.
    h1 = b1_ref[...]                                 # (H, 1) -> broadcasts to (H, bt)
    for j in range(d_in):                            # tiny static unroll
        h1 = h1 + w1_ref[:, j:j + 1] * x_ref[j:j + 1, :]
    h1 = jnp.maximum(h1, 0.0)                        # (H, bt)

    # Layer 2: (H, H) @ (H, bt) -> (H, bt); MXU, N = bt lane-dense, f32 acc.
    h2 = jnp.dot(w2_ref[...], h1, preferred_element_type=jnp.float32) + b2_ref[...]
    h2 = jnp.maximum(h2, 0.0)

    # Layer 3: (D_out, H) @ (H, bt) -> (D_out, bt); output lane-dense on bt.
    out = jnp.dot(w3_ref[...], h2, preferred_element_type=jnp.float32) + b3_ref[...]
    o_ref[...] = out.astype(o_ref.dtype)


def simple_mlp_forward(x, params, *, batch_tile=None):
    """x: (B, 2) float32. params: PyTorch-layout dict (w: (out,in), b: (out,))."""
    B, D_in = x.shape
    H, d_in_w = params["w1"].shape
    D_out = params["w3"].shape[0]
    assert d_in_w == D_in

    # Lane-aligned batch tile; prefer multiple grid steps for pipelining /
    # megacore when B is large, but never below 128 lanes.
    if batch_tile is None:
        if B <= 256:
            batch_tile = 128
        elif B <= 4096:
            batch_tile = 512
        else:
            batch_tile = 1024
    assert batch_tile % 128 == 0, "batch_tile must be a multiple of 128 (lane width)"

    num_tiles = pl.cdiv(B, batch_tile)
    B_pad = num_tiles * batch_tile

    # Wrapper-side layout plumbing: zero-pad batch, put batch on the lane axis.
    x_pad = jnp.zeros((B_pad, D_in), x.dtype).at[:B, :].set(x)
    x_t = x_pad.T                                    # (D_in, B_pad)
    b1 = params["b1"].reshape(H, 1)
    b2 = params["b2"].reshape(H, 1)
    b3 = params["b3"].reshape(D_out, 1)

    grid = (num_tiles,)
    resident = lambda shape: pl.BlockSpec(shape, lambda i: (0, 0))

    out_t = pl.pallas_call(
        mlp_kernel,
        out_shape=jax.ShapeDtypeStruct((D_out, B_pad), x.dtype),
        grid_spec=pltpu.PrefetchScalarGridSpec(
            num_scalar_prefetch=0,
            grid=grid,
            in_specs=[
                pl.BlockSpec((D_in, batch_tile), lambda i: (0, i)),   # x tile
                resident((H, D_in)),                                   # w1
                resident((H, 1)),                                      # b1
                resident((H, H)),                                      # w2
                resident((H, 1)),                                      # b2
                resident((D_out, H)),                                  # w3
                resident((D_out, 1)),                                  # b3
            ],
            out_specs=pl.BlockSpec((D_out, batch_tile), lambda i: (0, i)),
        ),
        compiler_params=pltpu.CompilerParams(
            dimension_semantics=("parallel",),
            vmem_limit_bytes=32 * 1024 * 1024,   # safe on v5e/v6e/v7x budgets
        ),
    )(x_t, params["w1"], b1, params["w2"], b2, params["w3"], b3)

    # Back to (B, D_out) row-major; drop batch padding.
    return out_t.T[:B, :]


def init_params(key, hidden_size=64, in_dim=2, out_dim=2, dtype=jnp.float32):
    """torch.nn.Linear-style init: U(-1/sqrt(fan_in), +1/sqrt(fan_in)); W (out, in)."""
    def linear(k, fan_in, fan_out):
        kw, kb = jax.random.split(k)
        bound = 1.0 / jnp.sqrt(fan_in)
        w = jax.random.uniform(kw, (fan_out, fan_in), dtype, -bound, bound)
        b = jax.random.uniform(kb, (fan_out,), dtype, -bound, bound)
        return w, b

    k1, k2, k3 = jax.random.split(key, 3)
    w1, b1 = linear(k1, in_dim, hidden_size)
    w2, b2 = linear(k2, hidden_size, hidden_size)
    w3, b3 = linear(k3, hidden_size, out_dim)
    return dict(w1=w1, b1=b1, w2=w2, b2=b2, w3=w3, b3=b3)


def reference_forward(x, p):
    h1 = jnp.maximum(x @ p["w1"].T + p["b1"], 0.0)
    h2 = jnp.maximum(h1 @ p["w2"].T + p["b2"], 0.0)
    return h2 @ p["w3"].T + p["b3"]


if __name__ == "__main__":
    key = jax.random.PRNGKey(0)

    # Case 1: tiny shape straight from the module spec (batch=8, hidden=32).
    k1x, k1p, k2x, k2p = jax.random.split(key, 4)
    x_small = jax.random.normal(k1x, (8, 2), jnp.float32)
    p_small = init_params(k1p, hidden_size=32)
    out_small = jax.block_until_ready(simple_mlp_forward(x_small, p_small))
    ref_small = reference_forward(x_small, p_small)
    assert out_small.shape == (8, 2)
    assert jnp.allclose(out_small, ref_small, atol=1e-4, rtol=1e-4), "mismatch (small)"

    # Case 2: non-multiple batch (exercises padding + multi-step parallel grid).
    x_big = jax.random.normal(k2x, (300, 2), jnp.float32)
    p_big = init_params(k2p, hidden_size=64)
    out_big = jax.block_until_ready(simple_mlp_forward(x_big, p_big, batch_tile=128))
    ref_big = reference_forward(x_big, p_big)
    assert out_big.shape == (300, 2)
    assert jnp.allclose(out_big, ref_big, atol=1e-4, rtol=1e-4), "mismatch (big)"

    print("KERNEL_OK")
</pallas_src>

<mosaic_0001>
module attributes {stable_mosaic.version = 11 : i64} {
  func.func @mlp_kernel(%arg0: i32, %arg1: memref<2x128xf32, #tpu.memory_space<vmem>>, %arg2: memref<32x2xf32, #tpu.memory_space<vmem>>, %arg3: memref<32x1xf32, #tpu.memory_space<vmem>>, %arg4: memref<32x32xf32, #tpu.memory_space<vmem>>, %arg5: memref<32x1xf32, #tpu.memory_space<vmem>>, %arg6: memref<2x32xf32, #tpu.memory_space<vmem>>, %arg7: memref<2x1xf32, #tpu.memory_space<vmem>>, %arg8: memref<2x128xf32, #tpu.memory_space<vmem>>) attributes {dimension_semantics = [#tpu.dimension_semantics<parallel>], iteration_bounds = array<i64: 1>, scalar_prefetch = 0 : i64, scratch_operands = 0 : i64, tpu.core_type = #tpu.core_type<tc>, window_params = [{transform_indices = @transform_0, window_bounds = array<i64: 2, 128>}, {pipeline_mode = #tpu.pipeline_mode<synchronous>, transform_indices = @transform_1, window_bounds = array<i64: 32, 2>}, {pipeline_mode = #tpu.pipeline_mode<synchronous>, transform_indices = @transform_2, window_bounds = array<i64: 32, 1>}, {pipeline_mode = #tpu.pipeline_mode<synchronous>, transform_indices = @transform_3, window_bounds = array<i64: 32, 32>}, {pipeline_mode = #tpu.pipeline_mode<synchronous>, transform_indices = @transform_4, window_bounds = array<i64: 32, 1>}, {pipeline_mode = #tpu.pipeline_mode<synchronous>, transform_indices = @transform_5, window_bounds = array<i64: 2, 32>}, {pipeline_mode = #tpu.pipeline_mode<synchronous>, transform_indices = @transform_6, window_bounds = array<i64: 2, 1>}, {transform_indices = @transform_7, window_bounds = array<i64: 2, 128>}]} {
    %c0 = arith.constant 0 : index
    %c0_0 = arith.constant 0 : index
    %0 = vector.load %arg3[%c0, %c0_0] : memref<32x1xf32, #tpu.memory_space<vmem>>, vector<32x1xf32>
    %c0_1 = arith.constant 0 : index
    %c0_2 = arith.constant 0 : index
    %1 = vector.load %arg2[%c0_1, %c0_2] : memref<32x2xf32, #tpu.memory_space<vmem>>, vector<32x1xf32>
    %c0_3 = arith.constant 0 : index
    %c0_4 = arith.constant 0 : index
    %2 = vector.load %arg1[%c0_3, %c0_4] : memref<2x128xf32, #tpu.memory_space<vmem>>, vector<1x128xf32>
    %3 = vector.broadcast %1 : vector<32x1xf32> to vector<32x128xf32>
    %4 = vector.broadcast %2 : vector<1x128xf32> to vector<32x128xf32>
    %5 = arith.mulf %3, %4 : vector<32x128xf32>
    %6 = vector.broadcast %0 : vector<32x1xf32> to vector<32x128xf32>
    %7 = arith.addf %6, %5 : vector<32x128xf32>
    %c0_5 = arith.constant 0 : index
    %c1 = arith.constant 1 : index
    %8 = vector.load %arg2[%c0_5, %c1] : memref<32x2xf32, #tpu.memory_space<vmem>>, vector<32x1xf32>
    %c1_6 = arith.constant 1 : index
    %c0_7 = arith.constant 0 : index
    %9 = vector.load %arg1[%c1_6, %c0_7] : memref<2x128xf32, #tpu.memory_space<vmem>>, vector<1x128xf32>
    %10 = vector.broadcast %8 : vector<32x1xf32> to vector<32x128xf32>
    %11 = vector.broadcast %9 : vector<1x128xf32> to vector<32x128xf32>
    %12 = arith.mulf %10, %11 : vector<32x128xf32>
    %13 = arith.addf %7, %12 : vector<32x128xf32>
    %cst = arith.constant 0.000000e+00 : f32
    %14 = vector.broadcast %cst : f32 to vector<32x128xf32>
    %15 = arith.maximumf %13, %14 : vector<32x128xf32>
    %c0_8 = arith.constant 0 : index
    %c0_9 = arith.constant 0 : index
    %16 = vector.load %arg4[%c0_8, %c0_9] : memref<32x32xf32, #tpu.memory_space<vmem>>, vector<32x32xf32>
    %cst_10 = arith.constant dense<0.000000e+00> : vector<32x128xf32>
    %17 = tpu.matmul %16, %15, %cst_10 {dimension_numbers = #tpu.dot_dimension_numbers<[1], [0], [0], [1], [0, 0, 1, 1], [], []>} : vector<32x32xf32>, vector<32x128xf32>, vector<32x128xf32> -> vector<32x128xf32>
    %c0_11 = arith.constant 0 : index
    %c0_12 = arith.constant 0 : index
    %18 = vector.load %arg5[%c0_11, %c0_12] : memref<32x1xf32, #tpu.memory_space<vmem>>, vector<32x1xf32>
    %19 = vector.broadcast %18 : vector<32x1xf32> to vector<32x128xf32>
    %20 = arith.addf %17, %19 : vector<32x128xf32>
    %cst_13 = arith.constant 0.000000e+00 : f32
    %21 = vector.broadcast %cst_13 : f32 to vector<32x128xf32>
    %22 = arith.maximumf %20, %21 : vector<32x128xf32>
    %c0_14 = arith.constant 0 : index
    %c0_15 = arith.constant 0 : index
    %23 = vector.load %arg6[%c0_14, %c0_15] : memref<2x32xf32, #tpu.memory_space<vmem>>, vector<2x32xf32>
    %cst_16 = arith.constant dense<0.000000e+00> : vector<2x128xf32>
    %24 = tpu.matmul %23, %22, %cst_16 {dimension_numbers = #tpu.dot_dimension_numbers<[1], [0], [0], [1], [0, 0, 1, 1], [], []>} : vector<2x32xf32>, vector<32x128xf32>, vector<2x128xf32> -> vector<2x128xf32>
    %c0_17 = arith.constant 0 : index
    %c0_18 = arith.constant 0 : index
    %25 = vector.load %arg7[%c0_17, %c0_18] : memref<2x1xf32, #tpu.memory_space<vmem>>, vector<2x1xf32>
    %26 = vector.broadcast %25 : vector<2x1xf32> to vector<2x128xf32>
    %27 = arith.addf %24, %26 : vector<2x128xf32>
    %c0_19 = arith.constant 0 : index
    %c0_20 = arith.constant 0 : index
    %28 = vector.load %arg8[%c0_19, %c0_20] : memref<2x128xf32, #tpu.memory_space<vmem>>, vector<2x128xf32>
    tpu.vector_store %arg8[%c0_19, %c0_20], %27 {strides = array<i32>} : memref<2x128xf32, #tpu.memory_space<vmem>>, vector<2x128xf32>,
    return
  }
  func.func @transform_0(%arg0: i32) -> (i32, i32) {
    %c0_i32 = arith.constant 0 : i32
    %c0_i32_0 = arith.constant 0 : i32
    return %c0_i32, %arg0 : i32, i32
  }
  func.func @transform_1(%arg0: i32) -> (i32, i32) {
    %c0_i32 = arith.constant 0 : i32
    %c0_i32_0 = arith.constant 0 : i32
    %c0_i32_1 = arith.constant 0 : i32
    return %c0_i32, %c0_i32_0 : i32, i32
  }
  func.func @transform_2(%arg0: i32) -> (i32, i32) {
    %c0_i32 = arith.constant 0 : i32
    %c0_i32_0 = arith.constant 0 : i32
    %c0_i32_1 = arith.constant 0 : i32
    return %c0_i32, %c0_i32_0 : i32, i32
  }
  func.func @transform_3(%arg0: i32) -> (i32, i32) {
    %c0_i32 = arith.constant 0 : i32
    %c0_i32_0 = arith.constant 0 : i32
    %c0_i32_1 = arith.constant 0 : i32
    return %c0_i32, %c0_i32_0 : i32, i32
  }
  func.func @transform_4(%arg0: i32) -> (i32, i32) {
    %c0_i32 = arith.constant 0 : i32
    %c0_i32_0 = arith.constant 0 : i32
    %c0_i32_1 = arith.constant 0 : i32
    return %c0_i32, %c0_i32_0 : i32, i32
  }
  func.func @transform_5(%arg0: i32) -> (i32, i32) {
    %c0_i32 = arith.constant 0 : i32
    %c0_i32_0 = arith.constant 0 : i32
    %c0_i32_1 = arith.constant 0 : i32
    return %c0_i32, %c0_i32_0 : i32, i32
  }
  func.func @transform_6(%arg0: i32) -> (i32, i32) {
    %c0_i32 = arith.constant 0 : i32
    %c0_i32_0 = arith.constant 0 : i32
    %c0_i32_1 = arith.constant 0 : i32
    return %c0_i32, %c0_i32_0 : i32, i32
  }
  func.func @transform_7(%arg0: i32) -> (i32, i32) {
    %c0_i32 = arith.constant 0 : i32
    %c0_i32_0 = arith.constant 0 : i32
    return %c0_i32, %arg0 : i32, i32
  }
}

</mosaic_0001>

<llo_original>
// kernel: tpu_custom_call.1
$region0: #{tpu_custom_call.1}
  #allocation0 [shape = 'u32[]', space=smem, size = 0x4, offset = 0x4, fixed_abs, tag = 'smem constant byte address 0x4 - core index']
  #allocation1 [shape = 'u32[144,128]{1,0:T(1,128)}', space=vmem, size = 0x12000, scoped, tag = 'internal scratch']
  %s0 = inlined_call_operand.vmem [shape: f32[2,128], index: 0, kind: input, shape index: {}]
  %s1 = inlined_call_operand.vmem [shape: f32[32,2], index: 1, kind: input, shape index: {}]
  %s2 = inlined_call_operand.vmem [shape: f32[32,1], index: 2, kind: input, shape index: {}]
  %s3 = inlined_call_operand.vmem [shape: f32[32,32], index: 3, kind: input, shape index: {}]
  %s4 = inlined_call_operand.vmem [shape: f32[32,1], index: 4, kind: input, shape index: {}]
  %s5 = inlined_call_operand.vmem [shape: f32[2,32], index: 5, kind: input, shape index: {}]
  %s6 = inlined_call_operand.vmem [shape: f32[2,1], index: 6, kind: input, shape index: {}]
  %s7 = inlined_call_operand.hbm [shape: f32[2,128], index: 7, kind: output, shape index: {}]
  %s8 = sld [smem:[#allocation0]]
  $region38: #{tpu_custom_call.1} parent=0
    _
  %s10 = ssub.s32 1, %s8
  %s11 = scalar_select 0, %s10, %s8
  $region1: #{tpu_custom_call.1} parent=0
    #allocation2 [shape = 'u8[1024]{0}', space=vmem, size = 0x400, scoped, tag = 'output window, operand 0, single buffered']
    #allocation3 [shape = 's32[1]{0}', space=sflag, size = 0x4, scoped, tag = 'scoped memory for tpu_custom_call.1']
    %12 = vsyncpa [#allocation3], 0
    // Predicated region
    $region2: #{tpu_custom_call.1} parent=1 // pred_check
      _
    $region3: #{tpu_custom_call.1} parent=1 // pred_check_branch
      %14 = sbr.rel (0) target = $region5
    $region4: #{tpu_custom_call.1} parent=1 // pred_region
      _
    $region5: #{tpu_custom_call.1} parent=1 // pred_fallthru
      _
    // Predicated region
    $region6: #{tpu_custom_call.1} parent=1 // pred_check
      _
    $region7: #{tpu_custom_call.1} parent=1 // pred_check_branch
      %16 = sbr.rel (0) target = $region9
    $region8: #{tpu_custom_call.1} parent=1 // pred_region
      _
    $region9: #{tpu_custom_call.1} parent=1 // pred_fallthru
      _
    // Predicated region
    $region10: #{tpu_custom_call.1} parent=1 // pred_check
      _
    $region11: #{tpu_custom_call.1} parent=1 // pred_check_branch
      %18 = sbr.rel (0) target = $region13
    $region12: #{tpu_custom_call.1} parent=1 // pred_region
      _
    $region13: #{tpu_custom_call.1} parent=1 // pred_fallthru
      _
    // Predicated region
    $region14: #{tpu_custom_call.1} parent=1 // pred_check
      _
    $region15: #{tpu_custom_call.1} parent=1 // pred_check_branch
      %20 = sbr.rel (0) target = $region17
    $region16: #{tpu_custom_call.1} parent=1 // pred_region
      _
    $region17: #{tpu_custom_call.1} parent=1 // pred_fallthru
      _
    // Predicated region
    $region18: #{tpu_custom_call.1} parent=1 // pred_check
      _
    $region19: #{tpu_custom_call.1} parent=1 // pred_check_branch
      %22 = sbr.rel (0) target = $region21
    $region20: #{tpu_custom_call.1} parent=1 // pred_region
      _
    $region21: #{tpu_custom_call.1} parent=1 // pred_fallthru
      _
    // Predicated region
    $region22: #{tpu_custom_call.1} parent=1 // pred_check
      _
    $region23: #{tpu_custom_call.1} parent=1 // pred_check_branch
      %24 = sbr.rel (0) target = $region25
    $region24: #{tpu_custom_call.1} parent=1 // pred_region
      _
    $region25: #{tpu_custom_call.1} parent=1 // pred_fallthru
      _
    // Predicated region
    $region26: #{tpu_custom_call.1} parent=1 // pred_check
      _
    $region27: #{tpu_custom_call.1} parent=1 // pred_check_branch
      %26 = sbr.rel (0) target = $region29
    $region28: #{tpu_custom_call.1} parent=1 // pred_region
      _
    $region29: #{tpu_custom_call.1} parent=1 // pred_fallthru
      _
    %v27 = vld [vmem:[%s2] sm:$0xff]
    %v28 = vld [vmem:[%s2 + $0x8] sm:$0xff]
    %v29 = vld [vmem:[%s2 + $0x10] sm:$0xff]
    %v30 = vld [vmem:[%s2 + $0x18] sm:$0xff]
    %v31 = vld [vmem:[%s1] sm:$0xff]
    %v32 = vld [vmem:[%s1 + $0x8] sm:$0xff]
    %v33 = vld [vmem:[%s1 + $0x10] sm:$0xff]
    %v34 = vld [vmem:[%s1 + $0x18] sm:$0xff]
    %v35 = vld [vmem:[%s0] sm:$0x1]
    %37 = vset.pattern.permute.xlu0 0
    %38 = vperm.xlu0 %37, %v31
    %v39 = vpop.permute.xlu0 %38
    %42 = vset.pattern.permute.xlu0 0
    %43 = vperm.xlu0 %42, %v32
    %v44 = vpop.permute.xlu0 %43
    %47 = vset.pattern.permute.xlu0 0
    %48 = vperm.xlu0 %47, %v33
    %v49 = vpop.permute.xlu0 %48
    %52 = vset.pattern.permute.xlu0 0
    %53 = vperm.xlu0 %52, %v34
    %v54 = vpop.permute.xlu0 %53
    %v56 = vlaneseq
    %v57 = vshrl.u32 %v56, 7
    %v58 = vsub.s32 0, %v57
    %v59 = vrot.slane %v35, %v58
    %v60 = vmul.f32 %v39, %v59
    %v61 = vmul.f32 %v44, %v59
    %v62 = vmul.f32 %v49, %v59
    %v63 = vmul.f32 %v54, %v59
    %65 = vset.pattern.permute.xlu0 0
    %66 = vperm.xlu0 %65, %v27
    %v67 = vpop.permute.xlu0 %66
    %70 = vset.pattern.permute.xlu0 0
    %71 = vperm.xlu0 %70, %v28
    %v72 = vpop.permute.xlu0 %71
    %75 = vset.pattern.permute.xlu0 0
    %76 = vperm.xlu0 %75, %v29
    %v77 = vpop.permute.xlu0 %76
    %80 = vset.pattern.permute.xlu0 0
    %81 = vperm.xlu0 %80, %v30
    %v82 = vpop.permute.xlu0 %81
    %v84 = vadd.f32 %v67, %v60
    %v85 = vadd.f32 %v72, %v61
    %v86 = vadd.f32 %v77, %v62
    %v87 = vadd.f32 %v82, %v63
    %v88 = vld [vmem:[%s0 + $0x1] sm:$0x1]
    %89 = vset.pattern.permute.xlu0 1
    %90 = vperm.xlu0 %89, %v31
    %v91 = vpop.permute.xlu0 %90
    %93 = vset.pattern.permute.xlu0 1
    %94 = vperm.xlu0 %93, %v32
    %v95 = vpop.permute.xlu0 %94
    %97 = vset.pattern.permute.xlu0 1
    %98 = vperm.xlu0 %97, %v33
    %v99 = vpop.permute.xlu0 %98
    %101 = vset.pattern.permute.xlu0 1
    %102 = vperm.xlu0 %101, %v34
    %v103 = vpop.permute.xlu0 %102
    %v105 = vlaneseq
    %v106 = vshrl.u32 %v105, 7
    %v107 = vsub.s32 0, %v106
    %v108 = vrot.slane %v88, %v107
    %v109 = vmul.f32 %v91, %v108
    %v110 = vmul.f32 %v95, %v108
    %v111 = vmul.f32 %v99, %v108
    %v112 = vmul.f32 %v103, %v108
    %v113 = vadd.f32 %v84, %v109
    %v114 = vadd.f32 %v85, %v110
    %v115 = vadd.f32 %v86, %v111
    %v116 = vadd.f32 %v87, %v112
    %v117 = vmax.f32 %v113, 0.0
    %v118 = vmax.f32 %v114, 0.0
    %v119 = vmax.f32 %v115, 0.0
    %v120 = vmax.f32 %v116, 0.0
    %v121 = vld [vmem:[%s3] sm:$0xff]
    %v122 = vld [vmem:[%s3 + $0x8] sm:$0xff]
    %v123 = vld [vmem:[%s3 + $0x10] sm:$0xff]
    %v124 = vld [vmem:[%s3 + $0x18] sm:$0xff]
    %v125 = vld [vmem:[%s4] sm:$0xff]
    %v126 = vld [vmem:[%s4 + $0x8] sm:$0xff]
    %v127 = vld [vmem:[%s4 + $0x10] sm:$0xff]
    %v128 = vld [vmem:[%s4 + $0x18] sm:$0xff]
    %130 = vset.pattern.permute.xlu0 0
    %131 = vperm.xlu0 %130, %v125
    %v132 = vpop.permute.xlu0 %131
    %135 = vset.pattern.permute.xlu0 0
    %136 = vperm.xlu0 %135, %v126
    %v137 = vpop.permute.xlu0 %136
    %140 = vset.pattern.permute.xlu0 0
    %141 = vperm.xlu0 %140, %v127
    %v142 = vpop.permute.xlu0 %141
    %145 = vset.pattern.permute.xlu0 0
    %146 = vperm.xlu0 %145, %v128
    %v147 = vpop.permute.xlu0 %146
    %vm149 = vcmask 261120
    %v151 = vsel %vm149, %v121, 0
    %v154 = vsel %vm149, %v122, 0
    %v157 = vsel %vm149, %v123, 0
    %v160 = vsel %vm149, %v124, 0
    %162 = vmatprep.subr.mxu0 0.0
    %163 = vmatpush1.msra.mxu0 0.0
    %164 = vmatprep.subr.mxu0 0.0
    %165 = vmatpush1.msra.mxu0 0.0
    %166 = vmatprep.subr.mxu0 0.0
    %167 = vmatpush1.msra.mxu0 0.0
    %168 = vmatprep.subr.mxu0 0.0
    %169 = vmatpush1.msra.mxu0 0.0
    %170 = vmatprep.subr.mxu0 0.0
    %171 = vmatpush1.msra.mxu0 0.0
    %172 = vmatprep.subr.mxu0 0.0
    %173 = vmatpush1.msra.mxu0 0.0
    %174 = vmatprep.subr.mxu0 0.0
    %175 = vmatpush1.msra.mxu0 0.0
    %176 = vmatprep.subr.mxu0 0.0
    %177 = vmatpush1.msra.mxu0 0.0
    %178 = vmatprep.subr.mxu0 0.0
    %179 = vmatpush1.msra.mxu0 0.0
    %180 = vmatprep.subr.mxu0 0.0
    %181 = vmatpush1.msra.mxu0 0.0
    %182 = vmatprep.subr.mxu0 0.0
    %183 = vmatpush1.msra.mxu0 0.0
    %184 = vmatprep.subr.mxu0 0.0
    %185 = vmatpush1.msra.mxu0 0.0
    %186 = vmatprep.subr.mxu0 0.0
    %187 = vmatpush1.msra.mxu0 %v120
    %188 = vmatprep.subr.mxu0 0.0
    %189 = vmatpush1.msra.mxu0 %v119
    %190 = vmatprep.subr.mxu0 0.0
    %191 = vmatpush1.msra.mxu0 %v118
    %192 = vmatprep.subr.mxu0 0.0
    %193 = vmatpush1.msra.mxu0 %v117
    %194 = vmatprep.subr.mxu0 0.0
    %195 = vmatpush2.msra.mxu0 0.0
    %196 = vmatprep.subr.mxu0 0.0
    %197 = vmatpush2.msra.mxu0 0.0
    %198 = vmatprep.subr.mxu0 0.0
    %199 = vmatpush2.msra.mxu0 0.0
    %200 = vmatprep.subr.mxu0 0.0
    %201 = vmatpush2.msra.mxu0 0.0
    %202 = vmatprep.subr.mxu0 0.0
    %203 = vmatpush2.msra.mxu0 0.0
    %204 = vmatprep.subr.mxu0 0.0
    %205 = vmatpush2.msra.mxu0 0.0
    %206 = vmatprep.subr.mxu0 0.0
    %207 = vmatpush2.msra.mxu0 0.0
    %208 = vmatprep.subr.mxu0 0.0
    %209 = vmatpush2.msra.mxu0 0.0
    %210 = vmatprep.subr.mxu0 0.0
    %211 = vmatpush2.msra.mxu0 0.0
    %212 = vmatprep.subr.mxu0 0.0
    %213 = vmatpush2.msra.mxu0 0.0
    %214 = vmatprep.subr.mxu0 0.0
    %215 = vmatpush2.msra.mxu0 0.0
    %216 = vmatprep.subr.mxu0 0.0
    %217 = vmatpush2.msra.mxu0 0.0
    %218 = vmatprep.subr.mxu0 0.0
    %219 = vmatpush2.msra.mxu0 0.0
    %220 = vmatprep.subr.mxu0 0.0
    %221 = vmatpush2.msra.mxu0 0.0
    %222 = vmatprep.subr.mxu0 0.0
    %223 = vmatpush2.msra.mxu0 0.0
    %224 = vmatprep.subr.mxu0 0.0
    %225 = vmatpush2.msra.mxu0 0.0
    %226 = vmatprep.mubr.f32.mxu0 0.0
    %227 = vmatmul.mubr.f32.gmra.mxu0 %v151
    %v228 = vpop.f32.mrf.mxu0
    %v229 = vadd.f32 %v132, %v228
    %v230 = vpop.f32.mrf.mxu0
    %231 = vmatprep.mubr.f32.mxu0 0.0
    %232 = vmatmul.mubr.f32.gmra.mxu0 %v154
    %v233 = vpop.f32.mrf.mxu0
    %v234 = vadd.f32 %v137, %v233
    %v235 = vpop.f32.mrf.mxu0
    %236 = vmatprep.mubr.f32.mxu0 0.0
    %237 = vmatmul.mubr.f32.gmra.mxu0 %v157
    %v238 = vpop.f32.mrf.mxu0
    %v239 = vadd.f32 %v142, %v238
    %v240 = vpop.f32.mrf.mxu0
    %241 = vmatprep.mubr.f32.mxu0 0.0
    %242 = vmatmul.mubr.f32.gmra.mxu0 %v160
    %v243 = vpop.f32.mrf.mxu0
    %v244 = vadd.f32 %v147, %v243
    %v245 = vpop.f32.mrf.mxu0
    %246 = vdwg.mxu0
    %v247 = vmax.f32 %v229, 0.0
    %v248 = vmax.f32 %v234, 0.0
    %v249 = vmax.f32 %v239, 0.0
    %v250 = vmax.f32 %v244, 0.0
    %v251 = vld [vmem:[%s5] sm:$0x3]
    %v252 = vld [vmem:[%s6] sm:$0x3]
    %254 = vset.pattern.permute.xlu0 0
    %255 = vperm.xlu0 %254, %v252
    %v256 = vpop.permute.xlu0 %255
    %v259 = vsel %vm149, %v251, 0
    %261 = vmatprep.subr.mxu0 0.0
    %262 = vmatpush1.msra.mxu0 0.0
    %263 = vmatprep.subr.mxu0 0.0
    %264 = vmatpush1.msra.mxu0 0.0
    %265 = vmatprep.subr.mxu0 0.0
    %266 = vmatpush1.msra.mxu0 0.0
    %267 = vmatprep.subr.mxu0 0.0
    %268 = vmatpush1.msra.mxu0 0.0
    %269 = vmatprep.subr.mxu0 0.0
    %270 = vmatpush1.msra.mxu0 0.0
    %271 = vmatprep.subr.mxu0 0.0
    %272 = vmatpush1.msra.mxu0 0.0
    %273 = vmatprep.subr.mxu0 0.0
    %274 = vmatpush1.msra.mxu0 0.0
    %275 = vmatprep.subr.mxu0 0.0
    %276 = vmatpush1.msra.mxu0 0.0
    %277 = vmatprep.subr.mxu0 0.0
    %278 = vmatpush1.msra.mxu0 0.0
    %279 = vmatprep.subr.mxu0 0.0
    %280 = vmatpush1.msra.mxu0 0.0
    %281 = vmatprep.subr.mxu0 0.0
    %282 = vmatpush1.msra.mxu0 0.0
    %283 = vmatprep.subr.mxu0 0.0
    %284 = vmatpush1.msra.mxu0 0.0
    %285 = vmatprep.subr.mxu0 0.0
    %286 = vmatpush1.msra.mxu0 %v250
    %287 = vmatprep.subr.mxu0 0.0
    %288 = vmatpush1.msra.mxu0 %v249
    %289 = vmatprep.subr.mxu0 0.0
    %290 = vmatpush1.msra.mxu0 %v248
    %291 = vmatprep.subr.mxu0 0.0
    %292 = vmatpush1.msra.mxu0 %v247
    %293 = vmatprep.subr.mxu0 0.0
    %294 = vmatpush2.msra.mxu0 0.0
    %295 = vmatprep.subr.mxu0 0.0
    %296 = vmatpush2.msra.mxu0 0.0
    %297 = vmatprep.subr.mxu0 0.0
    %298 = vmatpush2.msra.mxu0 0.0
    %299 = vmatprep.subr.mxu0 0.0
    %300 = vmatpush2.msra.mxu0 0.0
    %301 = vmatprep.subr.mxu0 0.0
    %302 = vmatpush2.msra.mxu0 0.0
    %303 = vmatprep.subr.mxu0 0.0
    %304 = vmatpush2.msra.mxu0 0.0
    %305 = vmatprep.subr.mxu0 0.0
    %306 = vmatpush2.msra.mxu0 0.0
    %307 = vmatprep.subr.mxu0 0.0
    %308 = vmatpush2.msra.mxu0 0.0
    %309 = vmatprep.subr.mxu0 0.0
    %310 = vmatpush2.msra.mxu0 0.0
    %311 = vmatprep.subr.mxu0 0.0
    %312 = vmatpush2.msra.mxu0 0.0
    %313 = vmatprep.subr.mxu0 0.0
    %314 = vmatpush2.msra.mxu0 0.0
    %315 = vmatprep.subr.mxu0 0.0
    %316 = vmatpush2.msra.mxu0 0.0
    %317 = vmatprep.subr.mxu0 0.0
    %318 = vmatpush2.msra.mxu0 0.0
    %319 = vmatprep.subr.mxu0 0.0
    %320 = vmatpush2.msra.mxu0 0.0
    %321 = vmatprep.subr.mxu0 0.0
    %322 = vmatpush2.msra.mxu0 0.0
    %323 = vmatprep.subr.mxu0 0.0
    %324 = vmatpush2.msra.mxu0 0.0
    %325 = vmatprep.mubr.f32.mxu0 0.0
    %326 = vmatmul.mubr.f32.gmra.mxu0 %v259
    %v327 = vpop.f32.mrf.mxu0
    %v328 = vadd.f32 %v256, %v327
    %v329 = vpop.f32.mrf.mxu0
    %330 = vdwg.mxu0
    %331 = vst [vmem:[#allocation2] sm:$0x3] %v328
    // Predicated region
    $region30: #{tpu_custom_call.1} parent=1 // pred_check
      _
    $region31: #{tpu_custom_call.1} parent=1 // pred_check_branch
      %333 = sbr.rel (0) target = $region33
    $region32: #{tpu_custom_call.1} parent=1 // pred_region
      %s335 = ssub.s32 32, 32
      %336 = vsyncadd [#allocation3], %s335
      %s338 = sshll.u32 [#allocation2], 4
      %s339 = int_to_ptr.vmem [resolvable:$true] %s338
      %341 = dma.vmem_to_hbm [thread:$0]  %s339, 32, %s7, [#allocation3]
    $region33: #{tpu_custom_call.1} parent=1 // pred_fallthru
      _
    // Predicated region
    $region34: #{tpu_custom_call.1} parent=1 // pred_check
      _
    $region35: #{tpu_custom_call.1} parent=1 // pred_check_branch
      %343 = sbr.rel (0) target = $region37
    $region36: #{tpu_custom_call.1} parent=1 // pred_region
      %344 = dma.done [#allocation3], 32
    $region37: #{tpu_custom_call.1} parent=1 // pred_fallthru
      _
    %345 = vsyncpa [#allocation3], 1

</llo_original>
